<compile_context>
chip_gen: v7x
topology: tpu7x:2x2x1
jax: 0.10.0
libtpu: 0.0.40
codegen_flags: <defaults>
</compile_context>

<pallas_src>
import jax
import jax.numpy as jnp
from jax import lax
from jax.experimental import pallas as pl
from jax.experimental.pallas import tpu as pltpu

# RGB -> YUV matrix (columns = Y, U, V), identical to the PyTorch module.
_RGB2YUV = (
    (0.299, -0.14714119, 0.61497538),    # weights on R
    (0.587, -0.28886916, -0.51496512),   # weights on G
    (0.114, 0.43601035, -0.10001026),    # weights on B
)
# diff-first rewrite: yuv(a) - yuv(b) = 0.5 * K^T (a - b); fold the 0.5 into K.
_HALF_K = tuple(tuple(0.5 * v for v in row) for row in _RGB2YUV)

_LANES = 128
_SUBLANES = 8
_MAX_TILE_ROWS = 1024    # 3ch * 1024 rows * 128 lanes * 4B = 1.5 MiB per input block
_CHUNK_ROWS = 256        # inner-loop slice size: bounds live temporaries (~128 KiB each)
_CORE_SPLIT = 2          # pixel tiles split over 2 "parallel" slots (v7x megacore)


def _make_kernel(tile_rows):
    """Builds the kernel for a given (static) tile_rows."""
    nfull = tile_rows // _CHUNK_ROWS
    rem = tile_rows % _CHUNK_ROWS   # multiple of 8 (tile_rows and _CHUNK_ROWS are)

    def kernel(img_ref, img_g_ref, out_ref):
        # img_ref / img_g_ref block: (1, 3, tile_rows, 128); out_ref block: (1, 1, 8, 128)

        def chunk_partial(r0, nrows):
            # Diff in the input dtype (bf16 VPU on v6e/v7x), one upcast per channel.
            def cdiff(c):
                a = img_ref[0, c, pl.ds(r0, nrows), :]
                b = img_g_ref[0, c, pl.ds(r0, nrows), :]
                return (a - b).astype(jnp.float32)

            dr, dg, db = cdiff(0), cdiff(1), cdiff(2)

            # Single 3x3 combine on the diffs (VPU scalar-constant FMAs; no MXU).
            dy = _HALF_K[0][0] * dr + _HALF_K[1][0] * dg + _HALF_K[2][0] * db
            du = _HALF_K[0][1] * dr + _HALF_K[1][1] * dg + _HALF_K[2][1] * db
            dv = _HALF_K[0][2] * dr + _HALF_K[1][2] * dg + _HALF_K[2][2] * db

            def huber(d):
                # SmoothL1, beta = 1.0 (PyTorch default), branch-free:
                # m = min(|d|, 1);  m * (|d| - 0.5 * m)  ==  where(|d|<1, 0.5 d^2, |d|-0.5)
                ad = jnp.abs(d)
                m = jnp.minimum(ad, 1.0)
                return m * (ad - 0.5 * m)

            tot = jnp.abs(dy) + huber(du) + huber(dv)
            # (nrows, 128) -> (8, 128): layout-preserving reshape + VPU adds (no XLU).
            return jnp.sum(tot.reshape(-1, _SUBLANES, _LANES), axis=0)

        acc = jnp.zeros((_SUBLANES, _LANES), jnp.float32)
        if nfull > 0:
            def body(i, a):
                r0 = pl.multiple_of(i * _CHUNK_ROWS, _CHUNK_ROWS)
                return a + chunk_partial(r0, _CHUNK_ROWS)
            acc = lax.fori_loop(0, nfull, body, acc, unroll=True)
        if rem:
            acc = acc + chunk_partial(nfull * _CHUNK_ROWS, rem)

        t = pl.program_id(2)

        @pl.when(t == 0)
        def _init():
            out_ref[0, 0, :, :] = acc

        @pl.when(t != 0)
        def _accum():
            out_ref[0, 0, :, :] += acc

    return kernel


def _round_up(x, m):
    return ((x + m - 1) // m) * m


def color_loss(image, image_g):
    """image, image_g: (N, 3, H, W) float arrays in [-1, 1]. Returns scalar f32 loss."""
    assert image.shape == image_g.shape
    n, c, h, w = image.shape
    assert c == 3, "ColorLoss expects RGB (3-channel) inputs"

    p = h * w
    rows = _round_up(pl.cdiv(p, _LANES), _SUBLANES)
    # Tile count: enough to stay <= _MAX_TILE_ROWS, rounded to the 2-way core split so
    # both v7x TensorCores always get tiles.  tile_rows = cdiv(rows, num_tiles) rounded
    # to 8 -> padding is at most a few rows, never whole tiles.
    num_tiles = max(_CORE_SPLIT, pl.cdiv(rows, _MAX_TILE_ROWS))
    num_tiles = _round_up(num_tiles, _CORE_SPLIT)
    tile_rows = _round_up(pl.cdiv(rows, num_tiles), _SUBLANES)
    total_rows = num_tiles * tile_rows
    tiles_per_core = num_tiles // _CORE_SPLIT
    p_pad = total_rows * _LANES

    def prep(x):
        # Lane-dense layout: flatten pixels, zero-pad the small residual (zero in BOTH
        # images -> zero diff -> contributes 0 to every sum), reshape to (N,3,rows,128).
        x = x.reshape(n, 3, p)
        if p_pad != p:
            x = jnp.pad(x, ((0, 0), (0, 0), (0, p_pad - p)))
        return x.reshape(n, 3, total_rows, _LANES)

    img = prep(image)
    img_g = prep(image_g)

    itemsize = jnp.dtype(image.dtype).itemsize
    cost = pl.CostEstimate(
        flops=34 * n * h * w,
        transcendentals=0,
        bytes_accessed=2 * n * 3 * p_pad * itemsize,
    )

    grid = (_CORE_SPLIT, n, tiles_per_core)
    partials = pl.pallas_call(
        _make_kernel(tile_rows),
        out_shape=jax.ShapeDtypeStruct((_CORE_SPLIT, n, _SUBLANES, _LANES), jnp.float32),
        grid=grid,
        in_specs=[
            pl.BlockSpec((1, 3, tile_rows, _LANES),
                         lambda s, b, t: (b, 0, s * tiles_per_core + t, 0)),
            pl.BlockSpec((1, 3, tile_rows, _LANES),
                         lambda s, b, t: (b, 0, s * tiles_per_core + t, 0)),
        ],
        out_specs=pl.BlockSpec((1, 1, _SUBLANES, _LANES),
                               lambda s, b, t: (s, b, 0, 0)),
        compiler_params=pltpu.CompilerParams(
            # core-split and batch axes write disjoint output blocks -> megacore-safe;
            # pixel-tile axis accumulates into the resident output block -> arbitrary.
            dimension_semantics=("parallel", "parallel", "arbitrary"),
        ),
        cost_estimate=cost,
    )(img, img_g)

    inv_count = 1.0 / float(n * h * w)   # each channel loss is a mean over N*H*W elems
    return jnp.sum(partials) * inv_count


def _color_loss_ref(image, image_g):
    """Plain-JAX reference mirroring the PyTorch module exactly."""
    k = jnp.array(_RGB2YUV, dtype=jnp.float32)

    def rgb_to_yuv(x):
        x = (x + 1.0) / 2.0
        return jnp.tensordot(x, k, axes=([1], [0]),
                             precision=jax.lax.Precision.HIGHEST)   # (N, H, W, 3)

    a = rgb_to_yuv(image)
    b = rgb_to_yuv(image_g)

    def huber(x, y):
        d = x - y
        ad = jnp.abs(d)
        return jnp.mean(jnp.where(ad < 1.0, 0.5 * d * d, ad - 0.5))

    return (
        jnp.mean(jnp.abs(a[..., 0] - b[..., 0]))
        + huber(a[..., 1], b[..., 1])
        + huber(a[..., 2], b[..., 2])
    )


if __name__ == "__main__":
    key = jax.random.PRNGKey(0)
    k1, k2 = jax.random.split(key)
    N, C, H, W = 2, 3, 16, 16   # RGB images in [-1, 1], NCHW
    image = jax.random.uniform(k1, (N, C, H, W), jnp.float32, minval=-1.0, maxval=1.0)
    image_g = jax.random.uniform(k2, (N, C, H, W), jnp.float32, minval=-1.0, maxval=1.0)

    loss = jax.block_until_ready(color_loss(image, image_g))
    ref = jax.block_until_ready(_color_loss_ref(image, image_g))
    assert jnp.allclose(loss, ref, rtol=1e-5, atol=1e-5), (loss, ref)
    print("KERNEL_OK")
</pallas_src>

<mosaic_0001>
module attributes {stable_mosaic.version = 11 : i64} {
  func.func @kernel(%arg0: i32, %arg1: i32, %arg2: i32, %arg3: memref<1x3x8x128xf32, #tpu.memory_space<vmem>>, %arg4: memref<1x3x8x128xf32, #tpu.memory_space<vmem>>, %arg5: memref<1x1x8x128xf32, #tpu.memory_space<vmem>>) attributes {dimension_semantics = [#tpu.dimension_semantics<parallel>, #tpu.dimension_semantics<parallel>, #tpu.dimension_semantics<arbitrary>], iteration_bounds = array<i64: 2, 2, 1>, scalar_prefetch = 0 : i64, scratch_operands = 0 : i64, tpu.core_type = #tpu.core_type<tc>, window_params = [{transform_indices = @transform_0, window_bounds = array<i64: 1, 3, 8, 128>}, {transform_indices = @transform_1, window_bounds = array<i64: 1, 3, 8, 128>}, {transform_indices = @transform_2, window_bounds = array<i64: 1, 1, 8, 128>}]} {
    %cst = arith.constant 0.000000e+00 : f32
    %0 = vector.broadcast %cst : f32 to vector<8x128xf32>
    %c0 = arith.constant 0 : index
    %c0_0 = arith.constant 0 : index
    %c0_1 = arith.constant 0 : index
    %c0_2 = arith.constant 0 : index
    %1 = vector.load %arg3[%c0, %c0_0, %c0_1, %c0_2] : memref<1x3x8x128xf32, #tpu.memory_space<vmem>>, vector<1x1x8x128xf32>
    %2 = vector.shape_cast %1 : vector<1x1x8x128xf32> to vector<8x128xf32>
    %c0_3 = arith.constant 0 : index
    %c0_4 = arith.constant 0 : index
    %c0_5 = arith.constant 0 : index
    %c0_6 = arith.constant 0 : index
    %3 = vector.load %arg4[%c0_3, %c0_4, %c0_5, %c0_6] : memref<1x3x8x128xf32, #tpu.memory_space<vmem>>, vector<1x1x8x128xf32>
    %4 = vector.shape_cast %3 : vector<1x1x8x128xf32> to vector<8x128xf32>
    %5 = arith.subf %2, %4 : vector<8x128xf32>
    %c0_7 = arith.constant 0 : index
    %c1 = arith.constant 1 : index
    %c0_8 = arith.constant 0 : index
    %c0_9 = arith.constant 0 : index
    %6 = vector.load %arg3[%c0_7, %c1, %c0_8, %c0_9] : memref<1x3x8x128xf32, #tpu.memory_space<vmem>>, vector<1x1x8x128xf32>
    %7 = vector.shape_cast %6 : vector<1x1x8x128xf32> to vector<8x128xf32>
    %c0_10 = arith.constant 0 : index
    %c1_11 = arith.constant 1 : index
    %c0_12 = arith.constant 0 : index
    %c0_13 = arith.constant 0 : index
    %8 = vector.load %arg4[%c0_10, %c1_11, %c0_12, %c0_13] : memref<1x3x8x128xf32, #tpu.memory_space<vmem>>, vector<1x1x8x128xf32>
    %9 = vector.shape_cast %8 : vector<1x1x8x128xf32> to vector<8x128xf32>
    %10 = arith.subf %7, %9 : vector<8x128xf32>
    %c0_14 = arith.constant 0 : index
    %c2 = arith.constant 2 : index
    %c0_15 = arith.constant 0 : index
    %c0_16 = arith.constant 0 : index
    %11 = vector.load %arg3[%c0_14, %c2, %c0_15, %c0_16] : memref<1x3x8x128xf32, #tpu.memory_space<vmem>>, vector<1x1x8x128xf32>
    %12 = vector.shape_cast %11 : vector<1x1x8x128xf32> to vector<8x128xf32>
    %c0_17 = arith.constant 0 : index
    %c2_18 = arith.constant 2 : index
    %c0_19 = arith.constant 0 : index
    %c0_20 = arith.constant 0 : index
    %13 = vector.load %arg4[%c0_17, %c2_18, %c0_19, %c0_20] : memref<1x3x8x128xf32, #tpu.memory_space<vmem>>, vector<1x1x8x128xf32>
    %14 = vector.shape_cast %13 : vector<1x1x8x128xf32> to vector<8x128xf32>
    %15 = arith.subf %12, %14 : vector<8x128xf32>
    %cst_21 = arith.constant 1.495000e-01 : f32
    %16 = vector.broadcast %cst_21 : f32 to vector<8x128xf32>
    %17 = arith.mulf %16, %5 : vector<8x128xf32>
    %cst_22 = arith.constant 2.935000e-01 : f32
    %18 = vector.broadcast %cst_22 : f32 to vector<8x128xf32>
    %19 = arith.mulf %18, %10 : vector<8x128xf32>
    %20 = arith.addf %17, %19 : vector<8x128xf32>
    %cst_23 = arith.constant 5.700000e-02 : f32
    %21 = vector.broadcast %cst_23 : f32 to vector<8x128xf32>
    %22 = arith.mulf %21, %15 : vector<8x128xf32>
    %23 = arith.addf %20, %22 : vector<8x128xf32>
    %cst_24 = arith.constant -0.0735705942 : f32
    %24 = vector.broadcast %cst_24 : f32 to vector<8x128xf32>
    %25 = arith.mulf %24, %5 : vector<8x128xf32>
    %cst_25 = arith.constant -0.144434586 : f32
    %26 = vector.broadcast %cst_25 : f32 to vector<8x128xf32>
    %27 = arith.mulf %26, %10 : vector<8x128xf32>
    %28 = arith.addf %25, %27 : vector<8x128xf32>
    %cst_26 = arith.constant 0.21800518 : f32
    %29 = vector.broadcast %cst_26 : f32 to vector<8x128xf32>
    %30 = arith.mulf %29, %15 : vector<8x128xf32>
    %31 = arith.addf %28, %30 : vector<8x128xf32>
    %cst_27 = arith.constant 0.307487696 : f32
    %32 = vector.broadcast %cst_27 : f32 to vector<8x128xf32>
    %33 = arith.mulf %32, %5 : vector<8x128xf32>
    %cst_28 = arith.constant -0.257482558 : f32
    %34 = vector.broadcast %cst_28 : f32 to vector<8x128xf32>
    %35 = arith.mulf %34, %10 : vector<8x128xf32>
    %36 = arith.addf %33, %35 : vector<8x128xf32>
    %cst_29 = arith.constant -0.0500051305 : f32
    %37 = vector.broadcast %cst_29 : f32 to vector<8x128xf32>
    %38 = arith.mulf %37, %15 : vector<8x128xf32>
    %39 = arith.addf %36, %38 : vector<8x128xf32>
    %40 = math.absf %23 : vector<8x128xf32>
    %41 = math.absf %31 : vector<8x128xf32>
    %cst_30 = arith.constant 1.000000e+00 : f32
    %42 = vector.broadcast %cst_30 : f32 to vector<8x128xf32>
    %43 = arith.minimumf %41, %42 : vector<8x128xf32>
    %cst_31 = arith.constant 5.000000e-01 : f32
    %44 = vector.broadcast %cst_31 : f32 to vector<8x128xf32>
    %45 = arith.mulf %44, %43 : vector<8x128xf32>
    %46 = arith.subf %41, %45 : vector<8x128xf32>
    %47 = arith.mulf %43, %46 : vector<8x128xf32>
    %48 = arith.addf %40, %47 : vector<8x128xf32>
    %49 = math.absf %39 : vector<8x128xf32>
    %cst_32 = arith.constant 1.000000e+00 : f32
    %50 = vector.broadcast %cst_32 : f32 to vector<8x128xf32>
    %51 = arith.minimumf %49, %50 : vector<8x128xf32>
    %cst_33 = arith.constant 5.000000e-01 : f32
    %52 = vector.broadcast %cst_33 : f32 to vector<8x128xf32>
    %53 = arith.mulf %52, %51 : vector<8x128xf32>
    %54 = arith.subf %49, %53 : vector<8x128xf32>
    %55 = arith.mulf %51, %54 : vector<8x128xf32>
    %56 = arith.addf %48, %55 : vector<8x128xf32>
    %57 = vector.shape_cast %56 : vector<8x128xf32> to vector<1x8x128xf32>
    %cst_34 = arith.constant dense<0.000000e+00> : vector<8x128xf32>
    %58 = vector.multi_reduction <add>, %57, %cst_34 [0] : vector<1x8x128xf32> to vector<8x128xf32>
    %59 = arith.addf %0, %58 : vector<8x128xf32>
    %c0_i32 = arith.constant 0 : i32
    %60 = arith.cmpi eq, %arg2, %c0_i32 : i32
    %61 = arith.extui %60 : i1 to i32
    %c0_i32_35 = arith.constant 0 : i32
    %62 = arith.cmpi ne, %61, %c0_i32_35 : i32
    scf.if %62 {
      %c0_38 = arith.constant 0 : index
      %c0_39 = arith.constant 0 : index
      %c0_40 = arith.constant 0 : index
      %c0_41 = arith.constant 0 : index
      %66 = vector.load %arg5[%c0_38, %c0_39, %c0_40, %c0_41] : memref<1x1x8x128xf32, #tpu.memory_space<vmem>>, vector<1x1x8x128xf32>
      %67 = vector.shape_cast %66 : vector<1x1x8x128xf32> to vector<8x128xf32>
      %68 = vector.shape_cast %59 : vector<8x128xf32> to vector<1x1x8x128xf32>
      tpu.vector_store %arg5[%c0_38, %c0_39, %c0_40, %c0_41], %68 {strides = array<i32>} : memref<1x1x8x128xf32, #tpu.memory_space<vmem>>, vector<1x1x8x128xf32>,
    } else {
    }
    %c0_i32_36 = arith.constant 0 : i32
    %63 = arith.cmpi ne, %arg2, %c0_i32_36 : i32
    %64 = arith.extui %63 : i1 to i32
    %c0_i32_37 = arith.constant 0 : i32
    %65 = arith.cmpi ne, %64, %c0_i32_37 : i32
    scf.if %65 {
      %c0_38 = arith.constant 0 : index
      %c0_39 = arith.constant 0 : index
      %c0_40 = arith.constant 0 : index
      %c0_41 = arith.constant 0 : index
      %66 = vector.load %arg5[%c0_38, %c0_39, %c0_40, %c0_41] : memref<1x1x8x128xf32, #tpu.memory_space<vmem>>, vector<1x1x8x128xf32>
      %67 = vector.shape_cast %66 : vector<1x1x8x128xf32> to vector<8x128xf32>
      %68 = arith.addf %67, %59 : vector<8x128xf32>
      %c0_42 = arith.constant 0 : index
      %c0_43 = arith.constant 0 : index
      %c0_44 = arith.constant 0 : index
      %c0_45 = arith.constant 0 : index
      %69 = vector.load %arg5[%c0_42, %c0_43, %c0_44, %c0_45] : memref<1x1x8x128xf32, #tpu.memory_space<vmem>>, vector<1x1x8x128xf32>
      %70 = vector.shape_cast %69 : vector<1x1x8x128xf32> to vector<8x128xf32>
      %71 = vector.shape_cast %68 : vector<8x128xf32> to vector<1x1x8x128xf32>
      tpu.vector_store %arg5[%c0_42, %c0_43, %c0_44, %c0_45], %71 {strides = array<i32>} : memref<1x1x8x128xf32, #tpu.memory_space<vmem>>, vector<1x1x8x128xf32>,
    } else {
    }
    return
  }
  func.func @transform_0(%arg0: i32, %arg1: i32, %arg2: i32) -> (i32, i32, i32, i32) {
    %c1_i32 = arith.constant 1 : i32
    %0 = arith.muli %arg0, %c1_i32 : i32
    %1 = arith.addi %0, %arg2 : i32
    %c0_i32 = arith.constant 0 : i32
    %c0_i32_0 = arith.constant 0 : i32
    %c0_i32_1 = arith.constant 0 : i32
    return %arg1, %c0_i32, %1, %c0_i32_0 : i32, i32, i32, i32
  }
  func.func @transform_1(%arg0: i32, %arg1: i32, %arg2: i32) -> (i32, i32, i32, i32) {
    %c1_i32 = arith.constant 1 : i32
    %0 = arith.muli %arg0, %c1_i32 : i32
    %1 = arith.addi %0, %arg2 : i32
    %c0_i32 = arith.constant 0 : i32
    %c0_i32_0 = arith.constant 0 : i32
    %c0_i32_1 = arith.constant 0 : i32
    return %arg1, %c0_i32, %1, %c0_i32_0 : i32, i32, i32, i32
  }
  func.func @transform_2(%arg0: i32, %arg1: i32, %arg2: i32) -> (i32, i32, i32, i32) {
    %c0_i32 = arith.constant 0 : i32
    %c0_i32_0 = arith.constant 0 : i32
    %c0_i32_1 = arith.constant 0 : i32
    return %arg0, %arg1, %c0_i32, %c0_i32_0 : i32, i32, i32, i32
  }
}

</mosaic_0001>

<llo_original>
// kernel: tpu_custom_call.1
$region0: #{tpu_custom_call.1}
  #allocation0 [shape = 'u32[]', space=smem, size = 0x4, offset = 0x4, fixed_abs, tag = 'smem constant byte address 0x4 - core index']
  #allocation1 [shape = 'u32[144,128]{1,0:T(1,128)}', space=vmem, size = 0x12000, scoped, tag = 'internal scratch']
  %s0 = inlined_call_operand.hbm [shape: f32[2,3,16,128], index: 0, kind: input, shape index: {}]
  %s1 = inlined_call_operand.hbm [shape: f32[2,3,16,128], index: 1, kind: input, shape index: {}]
  %s2 = inlined_call_operand.hbm [shape: f32[2,2,8,128], index: 2, kind: output, shape index: {}]
  %s3 = sld [smem:[#allocation0]]
  $region57: #{tpu_custom_call.1} parent=0
    _
  %s5 = ssub.s32 1, %s3
  %s6 = scalar_select 0, %s5, %s3
  $region1: #{tpu_custom_call.1} parent=0
    #allocation2 [shape = 'u8[24576]{0}', space=vmem, size = 0x6000, scoped, tag = 'input window, operand 0']
    #allocation3 [shape = 's32[2]{0}', space=sflag, size = 0x8, scoped, tag = 'scoped memory for tpu_custom_call.1']
    #allocation4 [shape = 's32[2]{0}', space=sflag, size = 0x8, scoped, tag = 'scoped memory for tpu_custom_call.1']
    #allocation5 [shape = 'u8[24576]{0}', space=vmem, size = 0x6000, scoped, tag = 'input window, operand 1']
    #allocation6 [shape = 's32[2]{0}', space=sflag, size = 0x8, scoped, tag = 'scoped memory for tpu_custom_call.1']
    #allocation7 [shape = 'u8[8192]{0}', space=vmem, size = 0x2000, scoped, tag = 'output window, operand 0']
    %7 = vsyncpa [#allocation3], 0
    %s8 = scalar_lea.sflag [#allocation3], 1
    %9 = vsyncpa %s8, 0
    %10 = vsyncpa [#allocation6], 0
    %s11 = scalar_lea.sflag [#allocation6], 1
    %12 = vsyncpa %s11, 0
    %13 = vsyncpa [#allocation4], 0
    %s14 = scalar_lea.sflag [#allocation4], 1
    %15 = vsyncpa %s14, 0
    loop: start=0, step=1, limit=6
    $region2: #{tpu_custom_call.1} parent=1 // loop_pre_header
      _
    $region3: #{tpu_custom_call.1} parent=1 // loop_header
      %s17 = sphi 0, %s21
      %p18 = scmp.ge.s32.totalorder %s17, 6
      %s24 = sphi 0, %s43
      %s25 = sphi 0, %s39
      %s26 = sphi 0, %s35
      %s27 = sphi 0, %s24
      %s28 = sphi 0, %s25
      %s29 = sphi 0, %s26
      %s30 = sphi 0, %s27
      %s31 = sphi 0, %s28
      %s32 = sphi 0, %s29
      %s50 = sphi 0, %s52
      %s53 = sphi 0, %s50
      %s54 = sphi 0, %s53
      %s70 = sphi 0, %s54
      %s80 = sphi 0, %s82
      %s83 = sphi 0, %s80
      %s84 = sphi 0, %s83
      %s100 = sphi 0, %s84
      %s108 = sphi 0, %s110
      %s111 = sphi 0, %s108
      %s112 = sphi 0, %s111
      %s128 = sphi 0, %s112
    $region4: #{tpu_custom_call.1} parent=1 // loop_header_branch
      %20 = sbr.rel (%p18) target = $region8
    $region5: #{tpu_custom_call.1} parent=1 // loop_body
      %s22 = ssub.s32 %s17, 1
      %s23 = ssub.s32 %s17, 2
      %s33 = sadd.s32 1, %s26
      %p34 = scmp.ge.s32.totalorder %s33, 1
      %s35 = scalar_select %p34, 0, %s33
      %s36 = sadd.s32 1, %s25
      %s37 = scalar_select %p34, %s36, %s25
      %p38 = scmp.ge.s32.totalorder %s37, 2
      %s39 = scalar_select %p38, 0, %s37
      %s40 = sadd.s32 1, %s24
      %s41 = scalar_select %p38, %s40, %s24
      %p42 = scmp.ge.s32.totalorder %s41, 2
      %s43 = scalar_select %p42, 0, %s41
      %s44 = sadd.s32 %s24, %s26
      %s45 = sadd.s32 %s43, %s35
      %s46 = ssub.s32 %s25, %s39
      %s47 = ssub.s32 %s44, %s45
      %s48 = sor.u32 %s46, %s47
      %p49 = scmp.eq.s32.totalorder %s48, 0
      %s51 = sadd.s32 %s50, 1
      %s52 = scalar_select %p49, %s50, %s51
      %p55 = pneg %p49
      %p56 = scmp.eq.s32.totalorder %s17, 3
      %p57 = por %p55, %p56
      %p58 = scmp.ne.s32.totalorder %s50, %s53
      %p59 = scmp.eq.s32.totalorder %s17, 0
      %p60 = por %p58, %p59
      %p61 = scmp.ne.s32.totalorder %s50, %s53
      %p62 = scmp.eq.s32.totalorder %s22, 3
      %p63 = por %p61, %p62
      %p64 = scmp.ne.s32.totalorder %s53, %s54
      %p65 = scmp.eq.s32.totalorder %s22, 0
      %p66 = por %p64, %p65
      %p67 = scmp.ne.s32.totalorder %s53, %s54
      %p68 = scmp.eq.s32.totalorder %s23, 3
      %p69 = por %p67, %p68
      %p71 = scmp.ne.s32.totalorder %s54, %s70
      %p72 = scmp.eq.s32.totalorder %s23, 0
      %p73 = por %p71, %p72
      %s74 = sadd.s32 %s24, %s26
      %s75 = sadd.s32 %s43, %s35
      %s76 = ssub.s32 %s25, %s39
      %s77 = ssub.s32 %s74, %s75
      %s78 = sor.u32 %s76, %s77
      %p79 = scmp.eq.s32.totalorder %s78, 0
      %s81 = sadd.s32 %s80, 1
      %s82 = scalar_select %p79, %s80, %s81
      %p85 = pneg %p79
      %p86 = scmp.eq.s32.totalorder %s17, 3
      %p87 = por %p85, %p86
      %p88 = scmp.ne.s32.totalorder %s80, %s83
      %p89 = scmp.eq.s32.totalorder %s17, 0
      %p90 = por %p88, %p89
      %p91 = scmp.ne.s32.totalorder %s80, %s83
      %p92 = scmp.eq.s32.totalorder %s22, 3
      %p93 = por %p91, %p92
      %p94 = scmp.ne.s32.totalorder %s83, %s84
      %p95 = scmp.eq.s32.totalorder %s22, 0
      %p96 = por %p94, %p95
      %p97 = scmp.ne.s32.totalorder %s83, %s84
      %p98 = scmp.eq.s32.totalorder %s23, 3
      %p99 = por %p97, %p98
      %p101 = scmp.ne.s32.totalorder %s84, %s100
      %p102 = scmp.eq.s32.totalorder %s23, 0
      %p103 = por %p101, %p102
      %s104 = ssub.s32 %s24, %s43
      %s105 = ssub.s32 %s25, %s39
      %s106 = sor.u32 %s104, %s105
      %p107 = scmp.eq.s32.totalorder %s106, 0
      %s109 = sadd.s32 %s108, 1
      %s110 = scalar_select %p107, %s108, %s109
      %p113 = pneg %p107
      %p114 = scmp.eq.s32.totalorder %s17, 3
      %p115 = por %p113, %p114
      %p116 = scmp.ne.s32.totalorder %s108, %s111
      %p117 = scmp.eq.s32.totalorder %s17, 0
      %p118 = por %p116, %p117
      %p119 = scmp.ne.s32.totalorder %s108, %s111
      %p120 = scmp.eq.s32.totalorder %s22, 3
      %p121 = por %p119, %p120
      %p122 = scmp.ne.s32.totalorder %s111, %s112
      %p123 = scmp.eq.s32.totalorder %s22, 0
      %p124 = por %p122, %p123
      %p125 = scmp.ne.s32.totalorder %s111, %s112
      %p126 = scmp.eq.s32.totalorder %s23, 3
      %p127 = por %p125, %p126
      %p129 = scmp.ne.s32.totalorder %s112, %s128
      %p130 = scmp.eq.s32.totalorder %s23, 0
      %p131 = por %p129, %p130
      %p132 = scmp.le.s32.totalorder 1, %s17
      %p133 = scmp.lt.s32.totalorder %s17, 5
      %p134 = pnand %p132, %p133
      %p135 = pneg %p134
      // Predicated region
      $region9: #{tpu_custom_call.1} parent=5 // pred_check
        _
      $region10: #{tpu_custom_call.1} parent=5 // pred_check_branch
        %137 = sbr.rel (%p134) target = $region12
      $region11: #{tpu_custom_call.1} parent=5 // pred_region
        %s138 = ssub.s32 %s17, 1
      $region12: #{tpu_custom_call.1} parent=5 // pred_fallthru
        _
      %p139 = scmp.lt.s32.totalorder %s17, 4
      // Predicated region
      $region13: #{tpu_custom_call.1} parent=5 // pred_check
        %p140 = pneg %p139
      $region14: #{tpu_custom_call.1} parent=5 // pred_check_branch
        %142 = sbr.rel (%p140) target = $region16
      $region15: #{tpu_custom_call.1} parent=5 // pred_region
        // Predicated region
        $region17: #{tpu_custom_call.1} parent=15 // pred_check
          %p143 = pneg %p60
        $region18: #{tpu_custom_call.1} parent=15 // pred_check_branch
          %145 = sbr.rel (%p143) target = $region20
        $region19: #{tpu_custom_call.1} parent=15 // pred_region
          %s146 = sand.u32 %s50, 1
          %s147 = scalar_lea.sflag [#allocation3], %s146
          %s148 = sand.u32 %s50, 1
          %s149 = smul.addr %s148, 24
          %s150 = scalar_lea.vmem [#allocation2], %s149
          %s151 = sadd.s32 %s24, %s26
          %s153 = ssub.s32 384, 384
          %154 = vsyncadd %s147, %s153
          %s155 = smul.addr %s25, 6
          %s156 = sadd.s32 %s151, %s155
          %s157 = smul.addr %s156, 128
          %s158 = scalar_lea.hbm %s0, %s157
          %s159 = sshll.u32 %s150, 4
          %s160 = int_to_ptr.vmem [resolvable:$true] %s159
          %165 = dma.hbm_to_vmem [thread:$0]  %s158, 384, %s160, %s147, 256, 128, 8
        $region20: #{tpu_custom_call.1} parent=15 // pred_fallthru
          _
        // Predicated region
        $region21: #{tpu_custom_call.1} parent=15 // pred_check
          %p166 = pneg %p90
        $region22: #{tpu_custom_call.1} parent=15 // pred_check_branch
          %168 = sbr.rel (%p166) target = $region24
        $region23: #{tpu_custom_call.1} parent=15 // pred_region
          %s169 = sand.u32 %s80, 1
          %s170 = scalar_lea.sflag [#allocation6], %s169
          %s171 = sand.u32 %s80, 1
          %s172 = smul.addr %s171, 24
          %s173 = scalar_lea.vmem [#allocation5], %s172
          %s174 = sadd.s32 %s24, %s26
          %s176 = ssub.s32 384, 384
          %177 = vsyncadd %s170, %s176
          %s178 = smul.addr %s25, 6
          %s179 = sadd.s32 %s174, %s178
          %s180 = smul.addr %s179, 128
          %s181 = scalar_lea.hbm %s1, %s180
          %s182 = sshll.u32 %s173, 4
          %s183 = int_to_ptr.vmem [resolvable:$true] %s182
          %188 = dma.hbm_to_vmem [thread:$0]  %s181, 384, %s183, %s170, 256, 128, 8
        $region24: #{tpu_custom_call.1} parent=15 // pred_fallthru
          _
      $region16: #{tpu_custom_call.1} parent=5 // pred_fallthru
        _
      %p189 = scmp.le.s32.totalorder 1, %s17
      %p190 = scmp.lt.s32.totalorder %s17, 5
      %p191 = pnand %p189, %p190
      %p192 = pneg %p191
      // Predicated region
      $region25: #{tpu_custom_call.1} parent=5 // pred_check
        _
      $region26: #{tpu_custom_call.1} parent=5 // pred_check_branch
        %194 = sbr.rel (%p191) target = $region28
      $region27: #{tpu_custom_call.1} parent=5 // pred_region
        %s195 = ssub.s32 %s17, 1
        %s196 = sand.u32 %s53, 1
        %s197 = scalar_lea.sflag [#allocation3], %s196
        %s198 = sand.u32 %s53, 1
        %s199 = smul.addr %s198, 24
        %s200 = scalar_lea.vmem [#allocation2], %s199
        // Predicated region
        $region29: #{tpu_custom_call.1} parent=27 // pred_check
          %p201 = pneg %p66
        $region30: #{tpu_custom_call.1} parent=27 // pred_check_branch
          %203 = sbr.rel (%p201) target = $region32
        $region31: #{tpu_custom_call.1} parent=27 // pred_region
          %204 = dma.done %s197, 384
        $region32: #{tpu_custom_call.1} parent=27 // pred_fallthru
          _
        %s205 = sand.u32 %s83, 1
        %s206 = scalar_lea.sflag [#allocation6], %s205
        %s207 = sand.u32 %s83, 1
        %s208 = smul.addr %s207, 24
        %s209 = scalar_lea.vmem [#allocation5], %s208
        // Predicated region
        $region33: #{tpu_custom_call.1} parent=27 // pred_check
          %p210 = pneg %p96
        $region34: #{tpu_custom_call.1} parent=27 // pred_check_branch
          %212 = sbr.rel (%p210) target = $region36
        $region35: #{tpu_custom_call.1} parent=27 // pred_region
          %213 = dma.done %s206, 384
        $region36: #{tpu_custom_call.1} parent=27 // pred_fallthru
          _
        %s214 = sand.u32 %s53, 1
        %s215 = scalar_lea.sflag [#allocation3], %s214
        %s216 = sand.u32 %s53, 1
        %s217 = smul.addr %s216, 24
        %s218 = scalar_lea.vmem [#allocation2], %s217
        %p219 = pneg %p66
        %p220 = pneg %p63
        %s221 = sand.u32 %s83, 1
        %s222 = scalar_lea.sflag [#allocation6], %s221
        %s223 = sand.u32 %s83, 1
        %s224 = smul.addr %s223, 24
        %s225 = scalar_lea.vmem [#allocation5], %s224
        %p226 = pneg %p96
        %p227 = pneg %p93
        %p228 = pneg %p124
        %p229 = pneg %p121
        %s230 = sand.u32 %s111, 1
        %s231 = scalar_lea.sflag [#allocation4], %s230
        %s232 = sand.u32 %s111, 1
        %s233 = smul.addr %s232, 8
        %s234 = scalar_lea.vmem [#allocation7], %s233
        %s235 = sadd.s32 %s27, %s29
        %s236 = sadd.s32 %s27, %s29
        %v237 = vld [vmem:[%s200] sm:$0xff]
        %v238 = vld [vmem:[%s209] sm:$0xff]
        %v239 = vsub.f32 %v237, %v238
        %s240 = scalar_lea.vmem %s200, 8 [#allocation2]
        %v241 = vld [vmem:[%s240] sm:$0xff]
        %s242 = scalar_lea.vmem %s209, 8 [#allocation5]
        %v243 = vld [vmem:[%s242] sm:$0xff]
        %v244 = vsub.f32 %v241, %v243
        %s245 = scalar_lea.vmem %s200, 16 [#allocation2]
        %v246 = vld [vmem:[%s245] sm:$0xff]
        %s247 = scalar_lea.vmem %s209, 16 [#allocation5]
        %v248 = vld [vmem:[%s247] sm:$0xff]
        %v249 = vsub.f32 %v246, %v248
        %v250 = vmul.f32 %v239, 0.1495
        %v251 = vmul.f32 %v244, 0.2935
        %v252 = vadd.f32 %v250, %v251
        %v253 = vmul.f32 %v249, 0.057
        %v254 = vadd.f32 %v252, %v253
        %v255 = vmul.f32 %v239, -0.073570594
        %v256 = vmul.f32 %v244, -0.14443459
        %v257 = vadd.f32 %v255, %v256
        %v258 = vmul.f32 %v249, 0.21800518
        %v259 = vadd.f32 %v257, %v258
        %v260 = vmul.f32 %v239, 0.3074877
        %v261 = vmul.f32 %v244, -0.25748256
        %v262 = vadd.f32 %v260, %v261
        %v263 = vmul.f32 %v249, -0.05000513
        %v264 = vadd.f32 %v262, %v263
        %v265 = vand.u32 2147483647, %v254
        %v266 = vand.u32 2147483647, %v259
        %v267 = vmin.f32 %v266, 1.0
        %v268 = vmul.f32 %v267, 0.5
        %v269 = vsub.f32 %v266, %v268
        %v270 = vmul.f32 %v267, %v269
        %v271 = vadd.f32 %v265, %v270
        %v272 = vand.u32 2147483647, %v264
        %v273 = vmin.f32 %v272, 1.0
        %v274 = vmul.f32 %v273, 0.5
        %v275 = vsub.f32 %v272, %v274
        %v276 = vmul.f32 %v273, %v275
        %v277 = vadd.f32 %v271, %v276
        %v278 = vadd.f32 %v277, 0.0
        %v279 = vadd.f32 %v278, 0.0
        %p280 = scmp.eq.s32.totalorder %s29, 0
        // Predicated region
        $region37: #{tpu_custom_call.1} parent=27 // pred_check
          %p281 = pneg %p280
        $region38: #{tpu_custom_call.1} parent=27 // pred_check_branch
          %283 = sbr.rel (%p281) target = $region40
        $region39: #{tpu_custom_call.1} parent=27 // pred_region
          %284 = vst [vmem:[%s234] sm:$0xff] %v279
        $region40: #{tpu_custom_call.1} parent=27 // pred_fallthru
          _
        %p285 = scmp.ne.s32.totalorder %s29, 0
        // Predicated region
        $region41: #{tpu_custom_call.1} parent=27 // pred_check
          %p286 = pneg %p285
        $region42: #{tpu_custom_call.1} parent=27 // pred_check_branch
          %288 = sbr.rel (%p286) target = $region44
        $region43: #{tpu_custom_call.1} parent=27 // pred_region
          %v289 = vld [vmem:[%s234] sm:$0xff]
          %v290 = vadd.f32 %v289, %v279
          %291 = vst [vmem:[%s234] sm:$0xff] %v290
        $region44: #{tpu_custom_call.1} parent=27 // pred_fallthru
          _
        %s292 = sand.u32 %s111, 1
        %s293 = scalar_lea.sflag [#allocation4], %s292
        %s294 = sand.u32 %s111, 1
        %s295 = smul.addr %s294, 8
        %s296 = scalar_lea.vmem [#allocation7], %s295
        // Predicated region
        $region45: #{tpu_custom_call.1} parent=27 // pred_check
          %p297 = pneg %p121
        $region46: #{tpu_custom_call.1} parent=27 // pred_check_branch
          %299 = sbr.rel (%p297) target = $region48
        $region47: #{tpu_custom_call.1} parent=27 // pred_region
          %s301 = ssub.s32 128, 128
          %302 = vsyncadd %s293, %s301
          %s303 = smul.addr %s27, 2
          %s304 = sadd.s32 %s28, %s303
          %s305 = smul.addr %s304, 128
          %s306 = scalar_lea.hbm %s2, %s305
          %s308 = sshll.u32 %s296, 4
          %s309 = int_to_ptr.vmem [resolvable:$true] %s308
          %311 = dma.vmem_to_hbm [thread:$0]  %s309, 128, %s306, %s293
        $region48: #{tpu_custom_call.1} parent=27 // pred_fallthru
          _
      $region28: #{tpu_custom_call.1} parent=5 // pred_fallthru
        _
      %p312 = scmp.le.s32.totalorder 2, %s17
      // Predicated region
      $region49: #{tpu_custom_call.1} parent=5 // pred_check
        %p313 = pneg %p312
      $region50: #{tpu_custom_call.1} parent=5 // pred_check_branch
        %315 = sbr.rel (%p313) target = $region52
      $region51: #{tpu_custom_call.1} parent=5 // pred_region
        %s316 = ssub.s32 %s17, 2
        // Predicated region
        $region53: #{tpu_custom_call.1} parent=51 // pred_check
          %p317 = pneg %p127
        $region54: #{tpu_custom_call.1} parent=51 // pred_check_branch
          %319 = sbr.rel (%p317) target = $region56
        $region55: #{tpu_custom_call.1} parent=51 // pred_region
          %s320 = sand.u32 %s112, 1
          %s321 = scalar_lea.sflag [#allocation4], %s320
          %s322 = sand.u32 %s112, 1
          %s323 = smul.addr %s322, 8
          %s324 = scalar_lea.vmem [#allocation7], %s323
          %325 = dma.done %s321, 128
        $region56: #{tpu_custom_call.1} parent=51 // pred_fallthru
          _
      $region52: #{tpu_custom_call.1} parent=5 // pred_fallthru
        _
    $region6: #{tpu_custom_call.1} parent=1 // loop_footer
      %s21 = sadd.s32 1, %s17
    $region7: #{tpu_custom_call.1} parent=1 // loop_footer_branch
      %16 = sbr.rel target = $region3
    $region8: #{tpu_custom_call.1} parent=1 // loop_exit
      _
    %326 = vsyncpa [#allocation3], 1
    %s327 = scalar_lea.sflag [#allocation3], 1
    %328 = vsyncpa %s327, 1
    %329 = vsyncpa [#allocation6], 1
    %s330 = scalar_lea.sflag [#allocation6], 1
    %331 = vsyncpa %s330, 1
    %332 = vsyncpa [#allocation4], 1
    %s333 = scalar_lea.sflag [#allocation4], 1
    %334 = vsyncpa %s333, 1

</llo_original>
